<compile_context>
chip_gen: v6e
topology: v6e:2x2x1
jax: 0.10.0
libtpu: 0.0.40
codegen_flags: <defaults>
</compile_context>

<pallas_src>
import jax
import jax.numpy as jnp
from jax.experimental import pallas as pl
from jax.experimental.pallas import tpu as pltpu

INPUT_DIM = 3
HIDDEN = 64
LANE = 128     # pad the feature dim to the 128-wide lane register for dense stores
TILE_B = 8     # sublane-aligned batch tile


def ffn_kernel(x_ref, w1_ref, b1_ref, w2_ref, b2_ref, o_ref):
    # x: (TILE_B, D_pad), w1: (D_pad, H), b1: (1, H),
    # w2: (H, D_pad),     b2: (1, D_pad), o: (TILE_B, D_pad)
    x = x_ref[...]
    h = jnp.dot(x, w1_ref[...], preferred_element_type=jnp.float32) + b1_ref[...]
    h = jnp.maximum(h, 0.0)                      # ReLU
    # dropout (eval/inference mode) == identity
    y = jnp.dot(h, w2_ref[...], preferred_element_type=jnp.float32) + b2_ref[...]
    o_ref[...] = y.astype(o_ref.dtype)


def feedforward(x, w1, b1, w2, b2, *, tile_b=TILE_B):
    """x: (B, D_in). Weights stored transposed: w1 (D_in, H), w2 (H, D_in).

    Zero-pads D_in -> multiple of 128 and B -> multiple of tile_b in the wrapper
    (zero rows/cols contribute nothing to the matmuls), runs a batch-tiled
    pallas_call, and slices the result back to (B, D_in).
    """
    B, d_in = x.shape
    H = w1.shape[1]
    d_pad = pl.cdiv(d_in, LANE) * LANE
    b_pad = pl.cdiv(B, tile_b) * tile_b

    xp = jnp.zeros((b_pad, d_pad), x.dtype).at[:B, :d_in].set(x)
    w1p = jnp.zeros((d_pad, H), w1.dtype).at[:d_in, :].set(w1)
    w2p = jnp.zeros((H, d_pad), w2.dtype).at[:, :d_in].set(w2)
    b2p = jnp.zeros((1, d_pad), b2.dtype).at[:, :d_in].set(b2)

    grid = (b_pad // tile_b,)
    itemsize = jnp.dtype(x.dtype).itemsize
    flops = 2 * b_pad * d_pad * H + 2 * b_pad * H * d_pad
    bytes_accessed = itemsize * (
        xp.size + w1p.size + b1.size + w2p.size + b2p.size + b_pad * d_pad)

    out = pl.pallas_call(
        ffn_kernel,
        out_shape=jax.ShapeDtypeStruct((b_pad, d_pad), x.dtype),
        grid=grid,
        in_specs=[
            # x: tiled along batch, lane-dense feature dim.
            pl.BlockSpec((tile_b, d_pad), lambda i: (i, 0)),
            # Weights / biases: same block every step -> VMEM-resident.
            pl.BlockSpec((d_pad, H), lambda i: (0, 0)),
            pl.BlockSpec((1, H), lambda i: (0, 0)),
            pl.BlockSpec((H, d_pad), lambda i: (0, 0)),
            pl.BlockSpec((1, d_pad), lambda i: (0, 0)),
        ],
        out_specs=pl.BlockSpec((tile_b, d_pad), lambda i: (i, 0)),
        compiler_params=pltpu.CompilerParams(
            dimension_semantics=("parallel",)),
        cost_estimate=pl.CostEstimate(
            flops=flops, transcendentals=0, bytes_accessed=bytes_accessed),
    )(xp, w1p, b1, w2p, b2p)

    return out[:B, :d_in]


def init_params(key, input_dim=INPUT_DIM, hidden=HIDDEN, dtype=jnp.float32):
    # Deterministic init mimicking PyTorch's nn.Linear default:
    # uniform(-1/sqrt(fan_in), 1/sqrt(fan_in)) for both weight and bias.
    k1, k2, k3, k4 = jax.random.split(key, 4)
    bound1 = 1.0 / jnp.sqrt(jnp.array(input_dim, dtype))
    bound2 = 1.0 / jnp.sqrt(jnp.array(hidden, dtype))
    # Stored already transposed: (in, out)
    w1 = jax.random.uniform(k1, (input_dim, hidden), dtype, -bound1, bound1)
    b1 = jax.random.uniform(k2, (1, hidden), dtype, -bound1, bound1)
    w2 = jax.random.uniform(k3, (hidden, input_dim), dtype, -bound2, bound2)
    b2 = jax.random.uniform(k4, (1, input_dim), dtype, -bound2, bound2)
    return w1, b1, w2, b2


def reference(x, w1, b1, w2, b2):
    h = jnp.maximum(x @ w1 + b1, 0.0)
    return h @ w2 + b2


if __name__ == "__main__":
    key = jax.random.PRNGKey(0)
    kx, kp = jax.random.split(key)

    batch = 8
    x = jax.random.normal(kx, (batch, INPUT_DIM), jnp.float32)
    w1, b1, w2, b2 = init_params(kp)

    out = feedforward(x, w1, b1, w2, b2)
    out = jax.block_until_ready(out)

    ref = reference(x, w1, b1, w2, b2)
    assert out.shape == (batch, INPUT_DIM)
    assert jnp.allclose(out, ref, atol=1e-5, rtol=1e-5)

    print("KERNEL_OK")
</pallas_src>

<mosaic_0001>
module attributes {stable_mosaic.version = 11 : i64} {
  func.func @ffn_kernel(%arg0: i32, %arg1: memref<8x128xf32, #tpu.memory_space<vmem>>, %arg2: memref<128x64xf32, #tpu.memory_space<vmem>>, %arg3: memref<1x64xf32, #tpu.memory_space<vmem>>, %arg4: memref<64x128xf32, #tpu.memory_space<vmem>>, %arg5: memref<1x128xf32, #tpu.memory_space<vmem>>, %arg6: memref<8x128xf32, #tpu.memory_space<vmem>>) attributes {dimension_semantics = [#tpu.dimension_semantics<parallel>], iteration_bounds = array<i64: 1>, scalar_prefetch = 0 : i64, scratch_operands = 0 : i64, tpu.core_type = #tpu.core_type<tc>, window_params = [{transform_indices = @transform_0, window_bounds = array<i64: 8, 128>}, {pipeline_mode = #tpu.pipeline_mode<synchronous>, transform_indices = @transform_1, window_bounds = array<i64: 128, 64>}, {pipeline_mode = #tpu.pipeline_mode<synchronous>, transform_indices = @transform_2, window_bounds = array<i64: 1, 64>}, {pipeline_mode = #tpu.pipeline_mode<synchronous>, transform_indices = @transform_3, window_bounds = array<i64: 64, 128>}, {pipeline_mode = #tpu.pipeline_mode<synchronous>, transform_indices = @transform_4, window_bounds = array<i64: 1, 128>}, {transform_indices = @transform_5, window_bounds = array<i64: 8, 128>}]} {
    %c0 = arith.constant 0 : index
    %c0_0 = arith.constant 0 : index
    %0 = vector.load %arg1[%c0, %c0_0] : memref<8x128xf32, #tpu.memory_space<vmem>>, vector<8x128xf32>
    %c0_1 = arith.constant 0 : index
    %c0_2 = arith.constant 0 : index
    %1 = vector.load %arg2[%c0_1, %c0_2] : memref<128x64xf32, #tpu.memory_space<vmem>>, vector<128x64xf32>
    %cst = arith.constant dense<0.000000e+00> : vector<8x64xf32>
    %2 = tpu.matmul %0, %1, %cst {dimension_numbers = #tpu.dot_dimension_numbers<[1], [0], [0], [1], [0, 0, 1, 1], [], []>} : vector<8x128xf32>, vector<128x64xf32>, vector<8x64xf32> -> vector<8x64xf32>
    %c0_3 = arith.constant 0 : index
    %c0_4 = arith.constant 0 : index
    %3 = vector.load %arg3[%c0_3, %c0_4] : memref<1x64xf32, #tpu.memory_space<vmem>>, vector<1x64xf32>
    %4 = vector.broadcast %3 : vector<1x64xf32> to vector<8x64xf32>
    %5 = arith.addf %2, %4 : vector<8x64xf32>
    %cst_5 = arith.constant 0.000000e+00 : f32
    %6 = vector.broadcast %cst_5 : f32 to vector<8x64xf32>
    %7 = arith.maximumf %5, %6 : vector<8x64xf32>
    %c0_6 = arith.constant 0 : index
    %c0_7 = arith.constant 0 : index
    %8 = vector.load %arg4[%c0_6, %c0_7] : memref<64x128xf32, #tpu.memory_space<vmem>>, vector<64x128xf32>
    %cst_8 = arith.constant dense<0.000000e+00> : vector<8x128xf32>
    %9 = tpu.matmul %7, %8, %cst_8 {dimension_numbers = #tpu.dot_dimension_numbers<[1], [0], [0], [1], [0, 0, 1, 1], [], []>} : vector<8x64xf32>, vector<64x128xf32>, vector<8x128xf32> -> vector<8x128xf32>
    %c0_9 = arith.constant 0 : index
    %c0_10 = arith.constant 0 : index
    %10 = vector.load %arg5[%c0_9, %c0_10] : memref<1x128xf32, #tpu.memory_space<vmem>>, vector<1x128xf32>
    %11 = vector.broadcast %10 : vector<1x128xf32> to vector<8x128xf32>
    %12 = arith.addf %9, %11 : vector<8x128xf32>
    %c0_11 = arith.constant 0 : index
    %c0_12 = arith.constant 0 : index
    %13 = vector.load %arg6[%c0_11, %c0_12] : memref<8x128xf32, #tpu.memory_space<vmem>>, vector<8x128xf32>
    tpu.vector_store %arg6[%c0_11, %c0_12], %12 {strides = array<i32>} : memref<8x128xf32, #tpu.memory_space<vmem>>, vector<8x128xf32>,
    return
  }
  func.func @transform_0(%arg0: i32) -> (i32, i32) {
    %c0_i32 = arith.constant 0 : i32
    %c0_i32_0 = arith.constant 0 : i32
    return %arg0, %c0_i32 : i32, i32
  }
  func.func @transform_1(%arg0: i32) -> (i32, i32) {
    %c0_i32 = arith.constant 0 : i32
    %c0_i32_0 = arith.constant 0 : i32
    %c0_i32_1 = arith.constant 0 : i32
    return %c0_i32, %c0_i32_0 : i32, i32
  }
  func.func @transform_2(%arg0: i32) -> (i32, i32) {
    %c0_i32 = arith.constant 0 : i32
    %c0_i32_0 = arith.constant 0 : i32
    %c0_i32_1 = arith.constant 0 : i32
    return %c0_i32, %c0_i32_0 : i32, i32
  }
  func.func @transform_3(%arg0: i32) -> (i32, i32) {
    %c0_i32 = arith.constant 0 : i32
    %c0_i32_0 = arith.constant 0 : i32
    %c0_i32_1 = arith.constant 0 : i32
    return %c0_i32, %c0_i32_0 : i32, i32
  }
  func.func @transform_4(%arg0: i32) -> (i32, i32) {
    %c0_i32 = arith.constant 0 : i32
    %c0_i32_0 = arith.constant 0 : i32
    %c0_i32_1 = arith.constant 0 : i32
    return %c0_i32, %c0_i32_0 : i32, i32
  }
  func.func @transform_5(%arg0: i32) -> (i32, i32) {
    %c0_i32 = arith.constant 0 : i32
    %c0_i32_0 = arith.constant 0 : i32
    return %arg0, %c0_i32 : i32, i32
  }
}

</mosaic_0001>

<llo_original>
// kernel: tpu_custom_call.1
$region0: #{tpu_custom_call.1}
  #allocation0 [shape = 'u32[]', space=smem, size = 0x4, offset = 0x4, fixed_abs, tag = 'smem constant byte address 0x4 - core index']
  #allocation1 [shape = 'u32[144,128]{1,0:T(1,128)}', space=vmem, size = 0x12000, scoped, tag = 'internal scratch']
  %s0 = inlined_call_operand.vmem [shape: f32[8,128], index: 0, kind: input, shape index: {}]
  %s1 = inlined_call_operand.vmem [shape: f32[128,64], index: 1, kind: input, shape index: {}]
  %s2 = inlined_call_operand.vmem [shape: f32[1,64], index: 2, kind: input, shape index: {}]
  %s3 = inlined_call_operand.vmem [shape: f32[64,128], index: 3, kind: input, shape index: {}]
  %s4 = inlined_call_operand.vmem [shape: f32[1,128], index: 4, kind: input, shape index: {}]
  %s5 = inlined_call_operand.hbm [shape: f32[8,128], index: 5, kind: output, shape index: {}]
  %s6 = sld [smem:[#allocation0]]
  $region30: #{tpu_custom_call.1} parent=0
    _
  %s8 = ssub.s32 1, %s6
  %s9 = scalar_select 0, %s8, %s6
  $region1: #{tpu_custom_call.1} parent=0
    #allocation2 [shape = 'u8[4096]{0}', space=vmem, size = 0x1000, scoped, tag = 'output window, operand 0, single buffered']
    #allocation3 [shape = 's32[1]{0}', space=sflag, size = 0x4, scoped, tag = 'scoped memory for tpu_custom_call.1']
    %10 = vsyncpa [#allocation3], 0
    // Predicated region
    $region2: #{tpu_custom_call.1} parent=1 // pred_check
      _
    $region3: #{tpu_custom_call.1} parent=1 // pred_check_branch
      %12 = sbr.rel (0) target = $region5
    $region4: #{tpu_custom_call.1} parent=1 // pred_region
      _
    $region5: #{tpu_custom_call.1} parent=1 // pred_fallthru
      _
    // Predicated region
    $region6: #{tpu_custom_call.1} parent=1 // pred_check
      _
    $region7: #{tpu_custom_call.1} parent=1 // pred_check_branch
      %14 = sbr.rel (0) target = $region9
    $region8: #{tpu_custom_call.1} parent=1 // pred_region
      _
    $region9: #{tpu_custom_call.1} parent=1 // pred_fallthru
      _
    // Predicated region
    $region10: #{tpu_custom_call.1} parent=1 // pred_check
      _
    $region11: #{tpu_custom_call.1} parent=1 // pred_check_branch
      %16 = sbr.rel (0) target = $region13
    $region12: #{tpu_custom_call.1} parent=1 // pred_region
      _
    $region13: #{tpu_custom_call.1} parent=1 // pred_fallthru
      _
    // Predicated region
    $region14: #{tpu_custom_call.1} parent=1 // pred_check
      _
    $region15: #{tpu_custom_call.1} parent=1 // pred_check_branch
      %18 = sbr.rel (0) target = $region17
    $region16: #{tpu_custom_call.1} parent=1 // pred_region
      _
    $region17: #{tpu_custom_call.1} parent=1 // pred_fallthru
      _
    // Predicated region
    $region18: #{tpu_custom_call.1} parent=1 // pred_check
      _
    $region19: #{tpu_custom_call.1} parent=1 // pred_check_branch
      %20 = sbr.rel (0) target = $region21
    $region20: #{tpu_custom_call.1} parent=1 // pred_region
      _
    $region21: #{tpu_custom_call.1} parent=1 // pred_fallthru
      _
    %v21 = vld [vmem:[%s0] sm:$0xff]
    %v22 = vld [vmem:[%s1] sm:$0xff]
    %v23 = vld [vmem:[%s1 + $0x8] sm:$0xff]
    %v24 = vld [vmem:[%s1 + $0x10] sm:$0xff]
    %v25 = vld [vmem:[%s1 + $0x18] sm:$0xff]
    %v26 = vld [vmem:[%s1 + $0x20] sm:$0xff]
    %v27 = vld [vmem:[%s1 + $0x28] sm:$0xff]
    %v28 = vld [vmem:[%s1 + $0x30] sm:$0xff]
    %v29 = vld [vmem:[%s1 + $0x38] sm:$0xff]
    %v30 = vld [vmem:[%s1 + $0x40] sm:$0xff]
    %v31 = vld [vmem:[%s1 + $0x48] sm:$0xff]
    %v32 = vld [vmem:[%s1 + $0x50] sm:$0xff]
    %v33 = vld [vmem:[%s1 + $0x58] sm:$0xff]
    %v34 = vld [vmem:[%s1 + $0x60] sm:$0xff]
    %v35 = vld [vmem:[%s1 + $0x68] sm:$0xff]
    %v36 = vld [vmem:[%s1 + $0x70] sm:$0xff]
    %v37 = vld [vmem:[%s1 + $0x78] sm:$0xff]
    %v38 = vld [vmem:[%s2] sm:$0x1]
    %v40 = vlaneseq
    %v41 = vshrl.u32 %v40, 7
    %v42 = vsub.s32 0, %v41
    %v43 = vrot.slane %v38, %v42
    %45 = vmatprep.subr.mxu0 0.0
    %46 = vmatpush1.msra.mxu0 %v37
    %47 = vmatprep.subr.mxu0 0.0
    %48 = vmatpush1.msra.mxu0 %v36
    %49 = vmatprep.subr.mxu0 0.0
    %50 = vmatpush1.msra.mxu0 %v35
    %51 = vmatprep.subr.mxu0 0.0
    %52 = vmatpush1.msra.mxu0 %v34
    %53 = vmatprep.subr.mxu0 0.0
    %54 = vmatpush1.msra.mxu0 %v33
    %55 = vmatprep.subr.mxu0 0.0
    %56 = vmatpush1.msra.mxu0 %v32
    %57 = vmatprep.subr.mxu0 0.0
    %58 = vmatpush1.msra.mxu0 %v31
    %59 = vmatprep.subr.mxu0 0.0
    %60 = vmatpush1.msra.mxu0 %v30
    %61 = vmatprep.subr.mxu0 0.0
    %62 = vmatpush1.msra.mxu0 %v29
    %63 = vmatprep.subr.mxu0 0.0
    %64 = vmatpush1.msra.mxu0 %v28
    %65 = vmatprep.subr.mxu0 0.0
    %66 = vmatpush1.msra.mxu0 %v27
    %67 = vmatprep.subr.mxu0 0.0
    %68 = vmatpush1.msra.mxu0 %v26
    %69 = vmatprep.subr.mxu0 0.0
    %70 = vmatpush1.msra.mxu0 %v25
    %71 = vmatprep.subr.mxu0 0.0
    %72 = vmatpush1.msra.mxu0 %v24
    %73 = vmatprep.subr.mxu0 0.0
    %74 = vmatpush1.msra.mxu0 %v23
    %75 = vmatprep.subr.mxu0 0.0
    %76 = vmatpush1.msra.mxu0 %v22
    %77 = vmatprep.subr.mxu0 0.0
    %78 = vmatpush2.msra.mxu0 0.0
    %79 = vmatprep.subr.mxu0 0.0
    %80 = vmatpush2.msra.mxu0 0.0
    %81 = vmatprep.subr.mxu0 0.0
    %82 = vmatpush2.msra.mxu0 0.0
    %83 = vmatprep.subr.mxu0 0.0
    %84 = vmatpush2.msra.mxu0 0.0
    %85 = vmatprep.subr.mxu0 0.0
    %86 = vmatpush2.msra.mxu0 0.0
    %87 = vmatprep.subr.mxu0 0.0
    %88 = vmatpush2.msra.mxu0 0.0
    %89 = vmatprep.subr.mxu0 0.0
    %90 = vmatpush2.msra.mxu0 0.0
    %91 = vmatprep.subr.mxu0 0.0
    %92 = vmatpush2.msra.mxu0 0.0
    %93 = vmatprep.subr.mxu0 0.0
    %94 = vmatpush2.msra.mxu0 0.0
    %95 = vmatprep.subr.mxu0 0.0
    %96 = vmatpush2.msra.mxu0 0.0
    %97 = vmatprep.subr.mxu0 0.0
    %98 = vmatpush2.msra.mxu0 0.0
    %99 = vmatprep.subr.mxu0 0.0
    %100 = vmatpush2.msra.mxu0 0.0
    %101 = vmatprep.subr.mxu0 0.0
    %102 = vmatpush2.msra.mxu0 0.0
    %103 = vmatprep.subr.mxu0 0.0
    %104 = vmatpush2.msra.mxu0 0.0
    %105 = vmatprep.subr.mxu0 0.0
    %106 = vmatpush2.msra.mxu0 0.0
    %107 = vmatprep.subr.mxu0 0.0
    %108 = vmatpush2.msra.mxu0 0.0
    %109 = vmatprep.mubr.f32.mxu0 0.0
    %110 = vmatmul.mubr.f32.gmra.mxu0 %v21
    %v111 = vpop.f32.mrf.mxu0
    %v112 = vadd.f32 %v43, %v111
    %v113 = vpop.f32.mrf.mxu0
    %114 = vdwg.mxu0
    %v115 = vmax.f32 %v112, 0.0
    %v116 = vld [vmem:[%s3] sm:$0xff]
    %v117 = vld [vmem:[%s3 + $0x8] sm:$0xff]
    %v118 = vld [vmem:[%s3 + $0x10] sm:$0xff]
    %v119 = vld [vmem:[%s3 + $0x18] sm:$0xff]
    %v120 = vld [vmem:[%s3 + $0x20] sm:$0xff]
    %v121 = vld [vmem:[%s3 + $0x28] sm:$0xff]
    %v122 = vld [vmem:[%s3 + $0x30] sm:$0xff]
    %v123 = vld [vmem:[%s3 + $0x38] sm:$0xff]
    %v124 = vld [vmem:[%s4] sm:$0x1]
    %v126 = vlaneseq
    %v127 = vshrl.u32 %v126, 7
    %v128 = vsub.s32 0, %v127
    %v129 = vrot.slane %v124, %v128
    %vm131 = vcmask 523264
    %v133 = vsel %vm131, %v115, 0
    %135 = vmatprep.subr.mxu0 0.0
    %136 = vmatpush1.msra.mxu0 0.0
    %137 = vmatprep.subr.mxu0 0.0
    %138 = vmatpush1.msra.mxu0 0.0
    %139 = vmatprep.subr.mxu0 0.0
    %140 = vmatpush1.msra.mxu0 0.0
    %141 = vmatprep.subr.mxu0 0.0
    %142 = vmatpush1.msra.mxu0 0.0
    %143 = vmatprep.subr.mxu0 0.0
    %144 = vmatpush1.msra.mxu0 0.0
    %145 = vmatprep.subr.mxu0 0.0
    %146 = vmatpush1.msra.mxu0 0.0
    %147 = vmatprep.subr.mxu0 0.0
    %148 = vmatpush1.msra.mxu0 0.0
    %149 = vmatprep.subr.mxu0 0.0
    %150 = vmatpush1.msra.mxu0 0.0
    %151 = vmatprep.subr.mxu0 0.0
    %152 = vmatpush1.msra.mxu0 %v123
    %153 = vmatprep.subr.mxu0 0.0
    %154 = vmatpush1.msra.mxu0 %v122
    %155 = vmatprep.subr.mxu0 0.0
    %156 = vmatpush1.msra.mxu0 %v121
    %157 = vmatprep.subr.mxu0 0.0
    %158 = vmatpush1.msra.mxu0 %v120
    %159 = vmatprep.subr.mxu0 0.0
    %160 = vmatpush1.msra.mxu0 %v119
    %161 = vmatprep.subr.mxu0 0.0
    %162 = vmatpush1.msra.mxu0 %v118
    %163 = vmatprep.subr.mxu0 0.0
    %164 = vmatpush1.msra.mxu0 %v117
    %165 = vmatprep.subr.mxu0 0.0
    %166 = vmatpush1.msra.mxu0 %v116
    %167 = vmatprep.subr.mxu0 0.0
    %168 = vmatpush2.msra.mxu0 0.0
    %169 = vmatprep.subr.mxu0 0.0
    %170 = vmatpush2.msra.mxu0 0.0
    %171 = vmatprep.subr.mxu0 0.0
    %172 = vmatpush2.msra.mxu0 0.0
    %173 = vmatprep.subr.mxu0 0.0
    %174 = vmatpush2.msra.mxu0 0.0
    %175 = vmatprep.subr.mxu0 0.0
    %176 = vmatpush2.msra.mxu0 0.0
    %177 = vmatprep.subr.mxu0 0.0
    %178 = vmatpush2.msra.mxu0 0.0
    %179 = vmatprep.subr.mxu0 0.0
    %180 = vmatpush2.msra.mxu0 0.0
    %181 = vmatprep.subr.mxu0 0.0
    %182 = vmatpush2.msra.mxu0 0.0
    %183 = vmatprep.subr.mxu0 0.0
    %184 = vmatpush2.msra.mxu0 0.0
    %185 = vmatprep.subr.mxu0 0.0
    %186 = vmatpush2.msra.mxu0 0.0
    %187 = vmatprep.subr.mxu0 0.0
    %188 = vmatpush2.msra.mxu0 0.0
    %189 = vmatprep.subr.mxu0 0.0
    %190 = vmatpush2.msra.mxu0 0.0
    %191 = vmatprep.subr.mxu0 0.0
    %192 = vmatpush2.msra.mxu0 0.0
    %193 = vmatprep.subr.mxu0 0.0
    %194 = vmatpush2.msra.mxu0 0.0
    %195 = vmatprep.subr.mxu0 0.0
    %196 = vmatpush2.msra.mxu0 0.0
    %197 = vmatprep.subr.mxu0 0.0
    %198 = vmatpush2.msra.mxu0 0.0
    %199 = vmatprep.mubr.f32.mxu0 0.0
    %200 = vmatmul.mubr.f32.gmra.mxu0 %v133
    %v201 = vpop.f32.mrf.mxu0
    %v202 = vadd.f32 %v129, %v201
    %v203 = vpop.f32.mrf.mxu0
    %204 = vdwg.mxu0
    %205 = vst [vmem:[#allocation2] sm:$0xff] %v202
    // Predicated region
    $region22: #{tpu_custom_call.1} parent=1 // pred_check
      _
    $region23: #{tpu_custom_call.1} parent=1 // pred_check_branch
      %207 = sbr.rel (0) target = $region25
    $region24: #{tpu_custom_call.1} parent=1 // pred_region
      %s209 = ssub.s32 128, 128
      %210 = vsyncadd [#allocation3], %s209
      %s212 = sshll.u32 [#allocation2], 4
      %s213 = int_to_ptr.vmem [resolvable:$true] %s212
      %215 = dma.vmem_to_hbm [thread:$0]  %s213, 128, %s5, [#allocation3]
    $region25: #{tpu_custom_call.1} parent=1 // pred_fallthru
      _
    // Predicated region
    $region26: #{tpu_custom_call.1} parent=1 // pred_check
      _
    $region27: #{tpu_custom_call.1} parent=1 // pred_check_branch
      %217 = sbr.rel (0) target = $region29
    $region28: #{tpu_custom_call.1} parent=1 // pred_region
      %218 = dma.done [#allocation3], 128
    $region29: #{tpu_custom_call.1} parent=1 // pred_fallthru
      _
    %219 = vsyncpa [#allocation3], 1

</llo_original>
